<compile_context>
chip_gen: v6e
topology: v6e:2x2x1
jax: 0.10.0
libtpu: 0.0.40
codegen_flags: <defaults>
</compile_context>

<pallas_src>
import functools
import math

import jax
import jax.numpy as jnp
from jax.experimental import pallas as pl
from jax.experimental.pallas import tpu as pltpu

# --- small, deterministic config (semantics identical to MalConvConfig) ---
VOCAB_SIZE = 64
EMBED_SIZE = 8          # E
CHANNELS = 128          # C
KERNEL_SIZE = 16        # K
STRIDE = 16             # stride == kernel_size (as in the default config 512/512)
PAD_TOKEN_ID = 0


def _round_up(x, m):
    return ((x + m - 1) // m) * m


def malconv_kernel(x_ref, w_ref, b_ref, o_ref, *, S, C, TS):
    """One (batch, S-tile) grid step: conv-as-matmul + gating + running max.

    x_ref : (1, TS, K*E)  bf16 window slab tile
    w_ref : (K*E, 2C)     bf16 fused conv weights [w1 | w2]
    b_ref : (1, 2C)       f32 fused conv biases  [b1 | b2]
    o_ref : (1, 1, C)     f32 pooled hidden state (resident across the S axis)
    """
    s_idx = pl.program_id(1)

    @pl.when(s_idx == 0)
    def _():
        o_ref[...] = jnp.full(o_ref.shape, -jnp.inf, dtype=o_ref.dtype)

    x = x_ref[0]                                                   # (TS, K*E) bf16
    y = jnp.dot(x, w_ref[...], preferred_element_type=jnp.float32)  # (TS, 2C) f32
    y = y + b_ref[...]
    c1 = y[:, :C]                                                  # lane-boundary slice
    c2 = y[:, C:]
    gated = c1 * jax.nn.sigmoid(c2)                                # (TS, C) f32

    # Mask padded (out-of-range) windows of the last ragged tile to -inf.
    row = jax.lax.broadcasted_iota(jnp.int32, (TS, C), 0) + s_idx * TS
    gated = jnp.where(row < S, gated, -jnp.inf)

    tile_max = jnp.max(gated, axis=0, keepdims=True)               # (1, C)
    o_ref[...] = jnp.maximum(o_ref[...], tile_max[None])           # running max


def malconv_forward(input_ids, params, *, ts_max=512):
    embed_w = params["embed"]                 # (V, E)
    w1, b1 = params["w1"], params["b1"]       # (C, E, K), (C,)
    w2, b2 = params["w2"], params["b2"]

    B, L = input_ids.shape
    E = embed_w.shape[1]
    C = w1.shape[0]
    K = w1.shape[2]
    assert STRIDE == K, "window-slab construction requires stride == kernel_size"
    S = math.floor((L - K) / STRIDE + 1)

    # Embedding lookup (gather) stays in plain JAX glue, cast to bf16: (B, L, E).
    emb = jnp.take(embed_w, input_ids, axis=0).astype(jnp.bfloat16)

    # Non-overlapping windows, flattened in (k, e) order: (B, S, K*E).
    emb_win = emb[:, : S * STRIDE].reshape(B, S, K * E)

    # Tile the S axis: TS multiple of 8, S padded up to a multiple of TS.
    TS = min(ts_max, _round_up(S, 8))
    TS = _round_up(TS, 8)
    S_pad = _round_up(S, TS)
    if S_pad != S:
        emb_win = jnp.pad(emb_win, ((0, 0), (0, S_pad - S), (0, 0)))

    # Fused conv weights: (C, E, K) -> (K, E, C) -> (K*E, C), then concat to 2C.
    w1_flat = jnp.transpose(w1, (2, 1, 0)).reshape(K * E, C)
    w2_flat = jnp.transpose(w2, (2, 1, 0)).reshape(K * E, C)
    w_cat = jnp.concatenate([w1_flat, w2_flat], axis=1).astype(jnp.bfloat16)  # (K*E, 2C)
    b_cat = jnp.concatenate([b1, b2]).reshape(1, 2 * C).astype(jnp.float32)   # (1, 2C)

    kernel = functools.partial(malconv_kernel, S=S, C=C, TS=TS)

    out = pl.pallas_call(
        kernel,
        out_shape=jax.ShapeDtypeStruct((B, 1, C), jnp.float32),
        grid_spec=pltpu.PrefetchScalarGridSpec(
            num_scalar_prefetch=0,
            grid=(B, S_pad // TS),
            in_specs=[
                pl.BlockSpec((1, TS, K * E), lambda b, s: (b, s, 0)),
                pl.BlockSpec((K * E, 2 * C), lambda b, s: (0, 0)),
                pl.BlockSpec((1, 2 * C), lambda b, s: (0, 0)),
            ],
            out_specs=pl.BlockSpec((1, 1, C), lambda b, s: (b, 0, 0)),
        ),
        compiler_params=pltpu.CompilerParams(
            # B parallel (megacore), S arbitrary (output block is a running-max
            # accumulator across the S axis).
            # TODO(synk): for B==1 on v7x, split S across the 2 TensorCores into
            # partial maxima and combine outside to keep both cores busy.
            dimension_semantics=("parallel", "arbitrary"),
            vmem_limit_bytes=32 * 1024 * 1024,
        ),
    )(emb_win, w_cat, b_cat)

    return out[:, 0, :]  # (B, C) == PyTorch hidden_states


def malconv_reference(input_ids, params):
    """Pure-JAX reference mirroring the PyTorch forward (NCW conv, exact f32)."""
    emb = jnp.take(params["embed"], input_ids, axis=0)   # (B, L, E)
    x = jnp.transpose(emb, (0, 2, 1))                    # (B, E, L)  (= NCW)

    def conv(x, w, b):
        y = jax.lax.conv_general_dilated(
            x, w, window_strides=(STRIDE,), padding="VALID",
            dimension_numbers=("NCH", "OIH", "NCH"),
            precision=jax.lax.Precision.HIGHEST)
        return y + b[None, :, None]

    c1 = conv(x, params["w1"], params["b1"])
    c2 = conv(x, params["w2"], params["b2"])
    g = c1 * jax.nn.sigmoid(c2)                          # (B, C, S)
    return jnp.max(g, axis=-1)                           # (B, C)


def _bf16_matched_params(params):
    """Quantize embed / conv weights bf16->f32, matching the kernel's inputs."""
    q = lambda a: a.astype(jnp.bfloat16).astype(jnp.float32)
    return {
        "embed": q(params["embed"]),
        "w1": q(params["w1"]), "b1": params["b1"],
        "w2": q(params["w2"]), "b2": params["b2"],
    }


def init_params(key):
    k_emb, k_w1, k_b1, k_w2, k_b2 = jax.random.split(key, 5)
    embed = 0.02 * jax.random.normal(k_emb, (VOCAB_SIZE, EMBED_SIZE), jnp.float32)
    embed = embed.at[PAD_TOKEN_ID].set(0.0)  # padding_idx semantics
    w1 = 0.05 * jax.random.normal(k_w1, (CHANNELS, EMBED_SIZE, KERNEL_SIZE), jnp.float32)
    b1 = 0.05 * jax.random.normal(k_b1, (CHANNELS,), jnp.float32)
    w2 = 0.05 * jax.random.normal(k_w2, (CHANNELS, EMBED_SIZE, KERNEL_SIZE), jnp.float32)
    b2 = 0.05 * jax.random.normal(k_b2, (CHANNELS,), jnp.float32)
    return {"embed": embed, "w1": w1, "b1": b1, "w2": w2, "b2": b2}


if __name__ == "__main__":
    key = jax.random.PRNGKey(0)
    k_params, k_ids1, k_ids2 = jax.random.split(key, 3)
    params = init_params(k_params)
    params_q = _bf16_matched_params(params)

    # Test 1: tiny sequence (single S tile, ragged/masked rows).
    B, L = 2, 64  # S = 4 conv output positions -> TS = 8, 4 padded rows masked
    ids1 = jax.random.randint(k_ids1, (B, L), 0, VOCAB_SIZE, dtype=jnp.int32)
    out1 = jax.block_until_ready(malconv_forward(ids1, params))
    assert out1.shape == (B, CHANNELS), out1.shape
    ref1_q = jax.block_until_ready(malconv_reference(ids1, params_q))
    ref1_f = jax.block_until_ready(malconv_reference(ids1, params))
    assert jnp.allclose(out1, ref1_q, atol=1e-4, rtol=1e-4), "mismatch vs bf16-matched ref"
    assert jnp.allclose(out1, ref1_f, atol=2e-2, rtol=2e-2), "mismatch vs f32 ref"

    # Test 2: multiple S tiles + ragged last tile (exercises the running-max
    # accumulator and -inf masking across grid steps).
    B2, L2 = 2, 320  # S = 20 -> TS = 8, 3 S-tiles, last tile has 4 padded rows
    ids2 = jax.random.randint(k_ids2, (B2, L2), 0, VOCAB_SIZE, dtype=jnp.int32)
    out2 = jax.block_until_ready(malconv_forward(ids2, params, ts_max=8))
    ref2_q = jax.block_until_ready(malconv_reference(ids2, params_q))
    ref2_f = jax.block_until_ready(malconv_reference(ids2, params))
    assert out2.shape == (B2, CHANNELS), out2.shape
    assert jnp.allclose(out2, ref2_q, atol=1e-4, rtol=1e-4), "mismatch vs bf16-matched ref"
    assert jnp.allclose(out2, ref2_f, atol=2e-2, rtol=2e-2), "mismatch vs f32 ref"

    print("KERNEL_OK")
</pallas_src>

<mosaic_0001>
module attributes {stable_mosaic.version = 11 : i64} {
  func.func @malconv_kernel(%arg0: i32, %arg1: i32, %arg2: memref<1x8x128xbf16, #tpu.memory_space<vmem>>, %arg3: memref<128x256xbf16, #tpu.memory_space<vmem>>, %arg4: memref<1x256xf32, #tpu.memory_space<vmem>>, %arg5: memref<1x1x128xf32, #tpu.memory_space<vmem>>) attributes {dimension_semantics = [#tpu.dimension_semantics<parallel>, #tpu.dimension_semantics<arbitrary>], iteration_bounds = array<i64: 2, 1>, scalar_prefetch = 0 : i64, scratch_operands = 0 : i64, tpu.core_type = #tpu.core_type<tc>, window_params = [{transform_indices = @transform_0, window_bounds = array<i64: 1, 8, 128>}, {pipeline_mode = #tpu.pipeline_mode<synchronous>, transform_indices = @transform_1, window_bounds = array<i64: 128, 256>}, {pipeline_mode = #tpu.pipeline_mode<synchronous>, transform_indices = @transform_2, window_bounds = array<i64: 1, 256>}, {transform_indices = @transform_3, window_bounds = array<i64: 1, 1, 128>}]} {
    %c0_i32 = arith.constant 0 : i32
    %0 = arith.cmpi eq, %arg1, %c0_i32 : i32
    %1 = arith.extui %0 : i1 to i32
    %c0_i32_0 = arith.constant 0 : i32
    %2 = arith.cmpi ne, %1, %c0_i32_0 : i32
    scf.if %2 {
      %cst_16 = arith.constant 0xFF800000 : f32
      %32 = vector.broadcast %cst_16 : f32 to vector<1x1x128xf32>
      %c0_17 = arith.constant 0 : index
      %c0_18 = arith.constant 0 : index
      %c0_19 = arith.constant 0 : index
      %33 = vector.load %arg5[%c0_17, %c0_18, %c0_19] : memref<1x1x128xf32, #tpu.memory_space<vmem>>, vector<1x1x128xf32>
      tpu.vector_store %arg5[%c0_17, %c0_18, %c0_19], %32 {strides = array<i32>} : memref<1x1x128xf32, #tpu.memory_space<vmem>>, vector<1x1x128xf32>,
    } else {
    }
    %c0 = arith.constant 0 : index
    %c0_1 = arith.constant 0 : index
    %c0_2 = arith.constant 0 : index
    %3 = vector.load %arg2[%c0, %c0_1, %c0_2] : memref<1x8x128xbf16, #tpu.memory_space<vmem>>, vector<1x8x128xbf16>
    %4 = vector.shape_cast %3 : vector<1x8x128xbf16> to vector<8x128xbf16>
    %c0_3 = arith.constant 0 : index
    %c0_4 = arith.constant 0 : index
    %5 = vector.load %arg3[%c0_3, %c0_4] : memref<128x256xbf16, #tpu.memory_space<vmem>>, vector<128x256xbf16>
    %cst = arith.constant dense<0.000000e+00> : vector<8x256xf32>
    %6 = tpu.matmul %4, %5, %cst {dimension_numbers = #tpu.dot_dimension_numbers<[1], [0], [0], [1], [0, 0, 1, 1], [], []>} : vector<8x128xbf16>, vector<128x256xbf16>, vector<8x256xf32> -> vector<8x256xf32>
    %c0_5 = arith.constant 0 : index
    %c0_6 = arith.constant 0 : index
    %7 = vector.load %arg4[%c0_5, %c0_6] : memref<1x256xf32, #tpu.memory_space<vmem>>, vector<1x256xf32>
    %8 = vector.broadcast %7 : vector<1x256xf32> to vector<8x256xf32>
    %9 = arith.addf %6, %8 : vector<8x256xf32>
    %10 = vector.extract_strided_slice %9 {offsets = [0, 0], sizes = [8, 128], strides = [1, 1]} : vector<8x256xf32> to vector<8x128xf32>
    %11 = vector.extract_strided_slice %9 {offsets = [0, 128], sizes = [8, 128], strides = [1, 1]} : vector<8x256xf32> to vector<8x128xf32>
    %12 = arith.negf %11 : vector<8x128xf32>
    %13 = math.exp %12 : vector<8x128xf32>
    %cst_7 = arith.constant 1.000000e+00 : f32
    %14 = vector.broadcast %cst_7 : f32 to vector<8x128xf32>
    %15 = arith.addf %14, %13 : vector<8x128xf32>
    %16 = arith.divf %14, %15 : vector<8x128xf32>
    %17 = arith.mulf %10, %16 : vector<8x128xf32>
    %18 = tpu.iota {dimensions = array<i32: 0>} : vector<8x128xi32>
    %c8_i32 = arith.constant 8 : i32
    %19 = arith.muli %arg1, %c8_i32 : i32
    %20 = vector.broadcast %19 : i32 to vector<8x128xi32>
    %21 = arith.addi %18, %20 : vector<8x128xi32>
    %c4_i32 = arith.constant 4 : i32
    %22 = vector.broadcast %c4_i32 : i32 to vector<8x128xi32>
    %23 = arith.cmpi slt, %21, %22 : vector<8x128xi32>
    %cst_8 = arith.constant 0xFF800000 : f32
    %24 = vector.broadcast %cst_8 : f32 to vector<8x128xf32>
    %25 = arith.select %23, %17, %24 : vector<8x128xi1>, vector<8x128xf32>
    %cst_9 = arith.constant dense<0xFF800000> : vector<128xf32>
    %26 = vector.multi_reduction <maximumf>, %25, %cst_9 [0] : vector<8x128xf32> to vector<128xf32>
    %27 = vector.shape_cast %26 : vector<128xf32> to vector<1x128xf32>
    %c0_10 = arith.constant 0 : index
    %c0_11 = arith.constant 0 : index
    %c0_12 = arith.constant 0 : index
    %28 = vector.load %arg5[%c0_10, %c0_11, %c0_12] : memref<1x1x128xf32, #tpu.memory_space<vmem>>, vector<1x1x128xf32>
    %29 = vector.shape_cast %27 : vector<1x128xf32> to vector<1x1x128xf32>
    %30 = arith.maximumf %28, %29 : vector<1x1x128xf32>
    %c0_13 = arith.constant 0 : index
    %c0_14 = arith.constant 0 : index
    %c0_15 = arith.constant 0 : index
    %31 = vector.load %arg5[%c0_13, %c0_14, %c0_15] : memref<1x1x128xf32, #tpu.memory_space<vmem>>, vector<1x1x128xf32>
    tpu.vector_store %arg5[%c0_13, %c0_14, %c0_15], %30 {strides = array<i32>} : memref<1x1x128xf32, #tpu.memory_space<vmem>>, vector<1x1x128xf32>,
    return
  }
  func.func @transform_0(%arg0: i32, %arg1: i32) -> (i32, i32, i32) {
    %c0_i32 = arith.constant 0 : i32
    %c0_i32_0 = arith.constant 0 : i32
    return %arg0, %arg1, %c0_i32 : i32, i32, i32
  }
  func.func @transform_1(%arg0: i32, %arg1: i32) -> (i32, i32) {
    %c0_i32 = arith.constant 0 : i32
    %c0_i32_0 = arith.constant 0 : i32
    %c0_i32_1 = arith.constant 0 : i32
    return %c0_i32, %c0_i32_0 : i32, i32
  }
  func.func @transform_2(%arg0: i32, %arg1: i32) -> (i32, i32) {
    %c0_i32 = arith.constant 0 : i32
    %c0_i32_0 = arith.constant 0 : i32
    %c0_i32_1 = arith.constant 0 : i32
    return %c0_i32, %c0_i32_0 : i32, i32
  }
  func.func @transform_3(%arg0: i32, %arg1: i32) -> (i32, i32, i32) {
    %c0_i32 = arith.constant 0 : i32
    %c0_i32_0 = arith.constant 0 : i32
    %c0_i32_1 = arith.constant 0 : i32
    return %arg0, %c0_i32, %c0_i32_0 : i32, i32, i32
  }
}

</mosaic_0001>

<llo_original>
// kernel: tpu_custom_call.1
$region0: #{tpu_custom_call.1}
  #allocation0 [shape = 'u32[]', space=smem, size = 0x4, offset = 0x4, fixed_abs, tag = 'smem constant byte address 0x4 - core index']
  #allocation1 [shape = 'u32[144,128]{1,0:T(1,128)}', space=vmem, size = 0x12000, scoped, tag = 'internal scratch']
  %s0 = inlined_call_operand.hbm [shape: bf16[2,8,128], index: 0, kind: input, shape index: {}]
  %s1 = inlined_call_operand.hbm [shape: bf16[128,256], index: 1, kind: input, shape index: {}]
  %s2 = inlined_call_operand.vmem [shape: f32[1,256], index: 2, kind: input, shape index: {}]
  %s3 = inlined_call_operand.hbm [shape: f32[2,1,128], index: 3, kind: output, shape index: {}]
  %s4 = sld [smem:[#allocation0]]
  $region57: #{tpu_custom_call.1} parent=0
    _
  %s6 = ssub.s32 1, %s4
  %s7 = scalar_select 0, %s6, %s4
  $region1: #{tpu_custom_call.1} parent=0
    #allocation2 [shape = 'u8[4096]{0}', space=vmem, size = 0x1000, scoped, tag = 'input window, operand 0']
    #allocation3 [shape = 's32[2]{0}', space=sflag, size = 0x8, scoped, tag = 'scoped memory for tpu_custom_call.1']
    #allocation4 [shape = 's32[2]{0}', space=sflag, size = 0x8, scoped, tag = 'scoped memory for tpu_custom_call.1']
    #allocation5 [shape = 'u8[65536]{0}', space=vmem, size = 0x10000, scoped, tag = 'input window, operand 1, single buffered']
    #allocation6 [shape = 's32[1]{0}', space=sflag, size = 0x4, scoped, tag = 'scoped memory for tpu_custom_call.1']
    #allocation7 [shape = 'u8[1024]{0}', space=vmem, size = 0x400, scoped, tag = 'output window, operand 0']
    %8 = vsyncpa [#allocation3], 0
    %s9 = scalar_lea.sflag [#allocation3], 1
    %10 = vsyncpa %s9, 0
    %11 = vsyncpa [#allocation6], 0
    %12 = vsyncpa [#allocation4], 0
    %s13 = scalar_lea.sflag [#allocation4], 1
    %14 = vsyncpa %s13, 0
    loop: start=0, step=1, limit=4
    $region2: #{tpu_custom_call.1} parent=1 // loop_pre_header
      _
    $region3: #{tpu_custom_call.1} parent=1 // loop_header
      %s16 = sphi 0, %s20
      %p17 = scmp.ge.s32.totalorder %s16, 4
      %s23 = sphi 0, %s35
      %s24 = sphi 0, %s31
      %s25 = sphi 0, %s23
      %s26 = sphi 0, %s24
      %s27 = sphi 0, %s25
      %s28 = sphi 0, %s26
      %s40 = sphi 0, %s42
      %s43 = sphi 0, %s40
      %s44 = sphi 0, %s43
      %s60 = sphi 0, %s44
      %s64 = sphi 0, %s64
      %s66 = sphi 0, %s64
      %s67 = sphi 0, %s66
      %s81 = sphi 0, %s67
      %s85 = sphi 0, %s85
      %s87 = sphi 0, %s85
      %s88 = sphi 0, %s87
      %s102 = sphi 0, %s88
      %s108 = sphi 0, %s110
      %s111 = sphi 0, %s108
      %s112 = sphi 0, %s111
      %s128 = sphi 0, %s112
    $region4: #{tpu_custom_call.1} parent=1 // loop_header_branch
      %19 = sbr.rel (%p17) target = $region8
    $region5: #{tpu_custom_call.1} parent=1 // loop_body
      %s21 = ssub.s32 %s16, 1
      %s22 = ssub.s32 %s16, 2
      %s29 = sadd.s32 1, %s24
      %p30 = scmp.ge.s32.totalorder %s29, 1
      %s31 = scalar_select %p30, 0, %s29
      %s32 = sadd.s32 1, %s23
      %s33 = scalar_select %p30, %s32, %s23
      %p34 = scmp.ge.s32.totalorder %s33, 2
      %s35 = scalar_select %p34, 0, %s33
      %s36 = ssub.s32 %s23, %s35
      %s37 = ssub.s32 %s24, %s31
      %s38 = sor.u32 %s36, %s37
      %p39 = scmp.eq.s32.totalorder %s38, 0
      %s41 = sadd.s32 %s40, 1
      %s42 = scalar_select %p39, %s40, %s41
      %p45 = pneg %p39
      %p46 = scmp.eq.s32.totalorder %s16, 1
      %p47 = por %p45, %p46
      %p48 = scmp.ne.s32.totalorder %s40, %s43
      %p49 = scmp.eq.s32.totalorder %s16, 0
      %p50 = por %p48, %p49
      %p51 = scmp.ne.s32.totalorder %s40, %s43
      %p52 = scmp.eq.s32.totalorder %s21, 1
      %p53 = por %p51, %p52
      %p54 = scmp.ne.s32.totalorder %s43, %s44
      %p55 = scmp.eq.s32.totalorder %s21, 0
      %p56 = por %p54, %p55
      %p57 = scmp.ne.s32.totalorder %s43, %s44
      %p58 = scmp.eq.s32.totalorder %s22, 1
      %p59 = por %p57, %p58
      %p61 = scmp.ne.s32.totalorder %s44, %s60
      %p62 = scmp.eq.s32.totalorder %s22, 0
      %p63 = por %p61, %p62
      %s65 = sadd.s32 %s64, 1
      %p68 = scmp.eq.s32.totalorder %s16, 1
      %p69 = scmp.ne.s32.totalorder %s64, %s66
      %p70 = scmp.eq.s32.totalorder %s16, 0
      %p71 = por %p69, %p70
      %p72 = scmp.ne.s32.totalorder %s64, %s66
      %p73 = scmp.eq.s32.totalorder %s21, 1
      %p74 = por %p72, %p73
      %p75 = scmp.ne.s32.totalorder %s66, %s67
      %p76 = scmp.eq.s32.totalorder %s21, 0
      %p77 = por %p75, %p76
      %p78 = scmp.ne.s32.totalorder %s66, %s67
      %p79 = scmp.eq.s32.totalorder %s22, 1
      %p80 = por %p78, %p79
      %p82 = scmp.ne.s32.totalorder %s67, %s81
      %p83 = scmp.eq.s32.totalorder %s22, 0
      %p84 = por %p82, %p83
      %s86 = sadd.s32 %s85, 1
      %p89 = scmp.eq.s32.totalorder %s16, 1
      %p90 = scmp.ne.s32.totalorder %s85, %s87
      %p91 = scmp.eq.s32.totalorder %s16, 0
      %p92 = por %p90, %p91
      %p93 = scmp.ne.s32.totalorder %s85, %s87
      %p94 = scmp.eq.s32.totalorder %s21, 1
      %p95 = por %p93, %p94
      %p96 = scmp.ne.s32.totalorder %s87, %s88
      %p97 = scmp.eq.s32.totalorder %s21, 0
      %p98 = por %p96, %p97
      %p99 = scmp.ne.s32.totalorder %s87, %s88
      %p100 = scmp.eq.s32.totalorder %s22, 1
      %p101 = por %p99, %p100
      %p103 = scmp.ne.s32.totalorder %s88, %s102
      %p104 = scmp.eq.s32.totalorder %s22, 0
      %p105 = por %p103, %p104
      %s106 = ssub.s32 %s23, %s35
      %p107 = scmp.eq.s32.totalorder %s106, 0
      %s109 = sadd.s32 %s108, 1
      %s110 = scalar_select %p107, %s108, %s109
      %p113 = pneg %p107
      %p114 = scmp.eq.s32.totalorder %s16, 1
      %p115 = por %p113, %p114
      %p116 = scmp.ne.s32.totalorder %s108, %s111
      %p117 = scmp.eq.s32.totalorder %s16, 0
      %p118 = por %p116, %p117
      %p119 = scmp.ne.s32.totalorder %s108, %s111
      %p120 = scmp.eq.s32.totalorder %s21, 1
      %p121 = por %p119, %p120
      %p122 = scmp.ne.s32.totalorder %s111, %s112
      %p123 = scmp.eq.s32.totalorder %s21, 0
      %p124 = por %p122, %p123
      %p125 = scmp.ne.s32.totalorder %s111, %s112
      %p126 = scmp.eq.s32.totalorder %s22, 1
      %p127 = por %p125, %p126
      %p129 = scmp.ne.s32.totalorder %s112, %s128
      %p130 = scmp.eq.s32.totalorder %s22, 0
      %p131 = por %p129, %p130
      %p132 = scmp.le.s32.totalorder 1, %s16
      %p133 = scmp.lt.s32.totalorder %s16, 3
      %p134 = pnand %p132, %p133
      %p135 = pneg %p134
      // Predicated region
      $region9: #{tpu_custom_call.1} parent=5 // pred_check
        _
      $region10: #{tpu_custom_call.1} parent=5 // pred_check_branch
        %137 = sbr.rel (%p134) target = $region12
      $region11: #{tpu_custom_call.1} parent=5 // pred_region
        %s138 = ssub.s32 %s16, 1
        // Predicated region
        $region13: #{tpu_custom_call.1} parent=11 // pred_check
          %p139 = pneg %p77
        $region14: #{tpu_custom_call.1} parent=11 // pred_check_branch
          %141 = sbr.rel (%p139) target = $region16
        $region15: #{tpu_custom_call.1} parent=11 // pred_region
          %s143 = ssub.s32 2048, 2048
          %144 = vsyncadd [#allocation6], %s143
          %s145 = sshll.u32 [#allocation5], 4
          %s146 = int_to_ptr.vmem [resolvable:$true] %s145
          %151 = dma.hbm_to_vmem [thread:$0]  %s1, 2048, %s146, [#allocation6], 128, 128, 8
        $region16: #{tpu_custom_call.1} parent=11 // pred_fallthru
          _
        // Predicated region
        $region17: #{tpu_custom_call.1} parent=11 // pred_check
          %p152 = pneg %p98
        $region18: #{tpu_custom_call.1} parent=11 // pred_check_branch
          %154 = sbr.rel (%p152) target = $region20
        $region19: #{tpu_custom_call.1} parent=11 // pred_region
          _
        $region20: #{tpu_custom_call.1} parent=11 // pred_fallthru
          _
      $region12: #{tpu_custom_call.1} parent=5 // pred_fallthru
        _
      %p155 = scmp.lt.s32.totalorder %s16, 2
      // Predicated region
      $region21: #{tpu_custom_call.1} parent=5 // pred_check
        %p156 = pneg %p155
      $region22: #{tpu_custom_call.1} parent=5 // pred_check_branch
        %158 = sbr.rel (%p156) target = $region24
      $region23: #{tpu_custom_call.1} parent=5 // pred_region
        // Predicated region
        $region25: #{tpu_custom_call.1} parent=23 // pred_check
          %p159 = pneg %p50
        $region26: #{tpu_custom_call.1} parent=23 // pred_check_branch
          %161 = sbr.rel (%p159) target = $region28
        $region27: #{tpu_custom_call.1} parent=23 // pred_region
          %s162 = sand.u32 %s40, 1
          %s163 = scalar_lea.sflag [#allocation3], %s162
          %s164 = sand.u32 %s40, 1
          %s165 = smul.addr %s164, 4
          %s166 = scalar_lea.vmem [#allocation2], %s165
          %s168 = ssub.s32 64, 64
          %169 = vsyncadd %s163, %s168
          %s170 = sadd.s32 %s24, %s23
          %s171 = smul.addr %s170, 64
          %s172 = scalar_lea.hbm %s0, %s171
          %s174 = sshll.u32 %s166, 4
          %s175 = int_to_ptr.vmem [resolvable:$true] %s174
          %177 = dma.hbm_to_vmem [thread:$0]  %s172, 64, %s175, %s163
        $region28: #{tpu_custom_call.1} parent=23 // pred_fallthru
          _
      $region24: #{tpu_custom_call.1} parent=5 // pred_fallthru
        _
      %p178 = scmp.le.s32.totalorder 1, %s16
      %p179 = scmp.lt.s32.totalorder %s16, 3
      %p180 = pnand %p178, %p179
      %p181 = pneg %p180
      // Predicated region
      $region29: #{tpu_custom_call.1} parent=5 // pred_check
        _
      $region30: #{tpu_custom_call.1} parent=5 // pred_check_branch
        %183 = sbr.rel (%p180) target = $region32
      $region31: #{tpu_custom_call.1} parent=5 // pred_region
        %s184 = ssub.s32 %s16, 1
        %s185 = sand.u32 %s43, 1
        %s186 = scalar_lea.sflag [#allocation3], %s185
        %s187 = sand.u32 %s43, 1
        %s188 = smul.addr %s187, 4
        %s189 = scalar_lea.vmem [#allocation2], %s188
        // Predicated region
        $region33: #{tpu_custom_call.1} parent=31 // pred_check
          %p190 = pneg %p56
        $region34: #{tpu_custom_call.1} parent=31 // pred_check_branch
          %192 = sbr.rel (%p190) target = $region36
        $region35: #{tpu_custom_call.1} parent=31 // pred_region
          %193 = dma.done %s186, 64
        $region36: #{tpu_custom_call.1} parent=31 // pred_fallthru
          _
        // Predicated region
        $region37: #{tpu_custom_call.1} parent=31 // pred_check
          %p194 = pneg %p77
        $region38: #{tpu_custom_call.1} parent=31 // pred_check_branch
          %196 = sbr.rel (%p194) target = $region40
        $region39: #{tpu_custom_call.1} parent=31 // pred_region
          %197 = dma.done [#allocation6], 2048
        $region40: #{tpu_custom_call.1} parent=31 // pred_fallthru
          _
        %s198 = sand.u32 %s43, 1
        %s199 = scalar_lea.sflag [#allocation3], %s198
        %s200 = sand.u32 %s43, 1
        %s201 = smul.addr %s200, 4
        %s202 = scalar_lea.vmem [#allocation2], %s201
        %p203 = pneg %p56
        %p204 = pneg %p53
        %p205 = pneg %p77
        %p206 = pneg %p74
        %p207 = pneg %p98
        %p208 = pneg %p95
        %p209 = pneg %p124
        %p210 = pneg %p121
        %s211 = sand.u32 %s111, 1
        %s212 = scalar_lea.sflag [#allocation4], %s211
        %s213 = sand.u32 %s111, 1
        %s214 = scalar_lea.vmem [#allocation7], %s213
        %p216 = scmp.eq.s32.totalorder %s26, 0
        // Predicated region
        $region41: #{tpu_custom_call.1} parent=31 // pred_check
          %p217 = pneg %p216
        $region42: #{tpu_custom_call.1} parent=31 // pred_check_branch
          %219 = sbr.rel (%p217) target = $region44
        $region43: #{tpu_custom_call.1} parent=31 // pred_region
          %220 = vst [vmem:[%s214] sm:$0x1] -inf
        $region44: #{tpu_custom_call.1} parent=31 // pred_fallthru
          _
        %v221 = vld [vmem:[%s189] sm:$0xf]
        %v222 = vld [vmem:[#allocation5] sm:$0xff]
        %v223 = vld [vmem:[#allocation5 + $0x8] sm:$0xff]
        %v224 = vld [vmem:[#allocation5 + $0x10] sm:$0xff]
        %v225 = vld [vmem:[#allocation5 + $0x18] sm:$0xff]
        %v226 = vld [vmem:[#allocation5 + $0x20] sm:$0xff]
        %v227 = vld [vmem:[#allocation5 + $0x28] sm:$0xff]
        %v228 = vld [vmem:[#allocation5 + $0x30] sm:$0xff]
        %v229 = vld [vmem:[#allocation5 + $0x38] sm:$0xff]
        %v230 = vld [vmem:[#allocation5 + $0x40] sm:$0xff]
        %v231 = vld [vmem:[#allocation5 + $0x48] sm:$0xff]
        %v232 = vld [vmem:[#allocation5 + $0x50] sm:$0xff]
        %v233 = vld [vmem:[#allocation5 + $0x58] sm:$0xff]
        %v234 = vld [vmem:[#allocation5 + $0x60] sm:$0xff]
        %v235 = vld [vmem:[#allocation5 + $0x68] sm:$0xff]
        %v236 = vld [vmem:[#allocation5 + $0x70] sm:$0xff]
        %v237 = vld [vmem:[#allocation5 + $0x78] sm:$0xff]
        %v238 = vld [vmem:[%s2] sm:$0x3]
        %v240 = vlaneseq
        %v241 = vshrl.u32 %v240, 7
        %v242 = vsub.s32 0, %v241
        %v243 = vrot.slane %v238, %v242
        %v244 = vlaneseq
        %v245 = vshrl.u32 %v244, 7
        %v246 = vsub.s32 1, %v245
        %v247 = vrot.slane %v238, %v246
        %v266 = vunpack.c.l.b16 %v222
        %v267 = vunpack.c.h.b16 %v222
        %v268 = vunpack.c.l.b16 %v223
        %v269 = vunpack.c.h.b16 %v223
        %v270 = vunpack.c.l.b16 %v224
        %v271 = vunpack.c.h.b16 %v224
        %v272 = vunpack.c.l.b16 %v225
        %v273 = vunpack.c.h.b16 %v225
        %v274 = vunpack.c.l.b16 %v226
        %v275 = vunpack.c.h.b16 %v226
        %v276 = vunpack.c.l.b16 %v227
        %v277 = vunpack.c.h.b16 %v227
        %v278 = vunpack.c.l.b16 %v228
        %v279 = vunpack.c.h.b16 %v228
        %v280 = vunpack.c.l.b16 %v229
        %v281 = vunpack.c.h.b16 %v229
        %v282 = vunpack.c.l.b16 %v230
        %v283 = vunpack.c.h.b16 %v230
        %v284 = vunpack.c.l.b16 %v231
        %v285 = vunpack.c.h.b16 %v231
        %v286 = vunpack.c.l.b16 %v232
        %v287 = vunpack.c.h.b16 %v232
        %v288 = vunpack.c.l.b16 %v233
        %v289 = vunpack.c.h.b16 %v233
        %v290 = vunpack.c.l.b16 %v234
        %v291 = vunpack.c.h.b16 %v234
        %v292 = vunpack.c.l.b16 %v235
        %v293 = vunpack.c.h.b16 %v235
        %v294 = vunpack.c.l.b16 %v236
        %v295 = vunpack.c.h.b16 %v236
        %v296 = vunpack.c.l.b16 %v237
        %v297 = vunpack.c.h.b16 %v237
        %v298 = vpack.c.b16 %v268, %v266
        %v299 = vpack.c.b16 %v269, %v267
        %v300 = vpack.c.b16 %v272, %v270
        %v301 = vpack.c.b16 %v273, %v271
        %v302 = vpack.c.b16 %v276, %v274
        %v303 = vpack.c.b16 %v277, %v275
        %v304 = vpack.c.b16 %v280, %v278
        %v305 = vpack.c.b16 %v281, %v279
        %v306 = vpack.c.b16 %v284, %v282
        %v307 = vpack.c.b16 %v285, %v283
        %v308 = vpack.c.b16 %v288, %v286
        %v309 = vpack.c.b16 %v289, %v287
        %v310 = vpack.c.b16 %v292, %v290
        %v311 = vpack.c.b16 %v293, %v291
        %v312 = vpack.c.b16 %v296, %v294
        %v313 = vpack.c.b16 %v297, %v295
        %330 = vmatprep.subr.bf16.mxu0 %v313
        %331 = vmatpush1.bf16.msra.mxu0 %v312
        %332 = vmatprep.subr.bf16.mxu0 %v311
        %333 = vmatpush1.bf16.msra.mxu0 %v310
        %334 = vmatprep.subr.bf16.mxu0 %v309
        %335 = vmatpush1.bf16.msra.mxu0 %v308
        %336 = vmatprep.subr.bf16.mxu0 %v307
        %337 = vmatpush1.bf16.msra.mxu0 %v306
        %338 = vmatprep.subr.bf16.mxu0 %v305
        %339 = vmatpush1.bf16.msra.mxu0 %v304
        %340 = vmatprep.subr.bf16.mxu0 %v303
        %341 = vmatpush1.bf16.msra.mxu0 %v302
        %342 = vmatprep.subr.bf16.mxu0 %v301
        %343 = vmatpush1.bf16.msra.mxu0 %v300
        %344 = vmatprep.subr.bf16.mxu0 %v299
        %345 = vmatpush1.bf16.msra.mxu0 %v298
        %346 = vmatprep.subr.bf16.mxu0 0
        %347 = vmatpush2.bf16.msra.mxu0 0
        %348 = vmatprep.subr.bf16.mxu0 0
        %349 = vmatpush2.bf16.msra.mxu0 0
        %350 = vmatprep.subr.bf16.mxu0 0
        %351 = vmatpush2.bf16.msra.mxu0 0
        %352 = vmatprep.subr.bf16.mxu0 0
        %353 = vmatpush2.bf16.msra.mxu0 0
        %354 = vmatprep.subr.bf16.mxu0 0
        %355 = vmatpush2.bf16.msra.mxu0 0
        %356 = vmatprep.subr.bf16.mxu0 0
        %357 = vmatpush2.bf16.msra.mxu0 0
        %358 = vmatprep.subr.bf16.mxu0 0
        %359 = vmatpush2.bf16.msra.mxu0 0
        %360 = vmatprep.subr.bf16.mxu0 0
        %361 = vmatpush2.bf16.msra.mxu0 0
        %362 = vmatprep.mubr.bf16.mxu0 0
        %363 = vmatmul.mubr.bf16.gmra.mxu0 %v221
        %v364 = vpop.f32.mrf.mxu0
        %v365 = vadd.f32 %v243, %v364
        %v366 = vpop.f32.mrf.mxu0
        %v367 = vadd.f32 %v247, %v366
        %v368 = vpop.f32.mrf.mxu0
        %v369 = vpop.f32.mrf.mxu0
        %370 = vdwg.mxu0
        %v371 = vxor.u32 %v367, 2147483648
        %v372 = vmul.f32 %v371, 1.442695
        %v373 = vpow.pop %v372
        %v374 = vadd.f32 %v373, 1.0
        %v375 = vrcp.pop %v374
        %v376 = vmul.f32 1.0, %v375
        %v377 = vmul.f32 %v365, %v376
        %v378 = vlaneseq
        %v379 = vshrl.u32 %v378, 7
        %s380 = smul.u32 %s26, 8
        %v381 = vstv %s380
        %v382 = vadd.s32 %v379, %v381
        %vm383 = vcmp.lt.s32.totalorder %v382, 4
        %v384 = vsel %vm383, %v377, -inf
        %v385 = vrot.slane %v384, 4
        %v386 = vmax.f32 %v384, %v385
        %v387 = vrot.slane %v386, 2
        %v388 = vmax.f32 %v386, %v387
        %v389 = vrot.slane %v388, 1
        %v390 = vmax.f32 %v388, %v389
        %v391 = vld [vmem:[%s214] sm:$0x1]
        %v392 = vmax.f32 %v391, %v390
        %393 = vst [vmem:[%s214] sm:$0x1] %v392
        %s394 = sand.u32 %s111, 1
        %s395 = scalar_lea.sflag [#allocation4], %s394
        %s396 = sand.u32 %s111, 1
        %s397 = scalar_lea.vmem [#allocation7], %s396
        // Predicated region
        $region45: #{tpu_custom_call.1} parent=31 // pred_check
          %p398 = pneg %p121
        $region46: #{tpu_custom_call.1} parent=31 // pred_check_branch
          %400 = sbr.rel (%p398) target = $region48
        $region47: #{tpu_custom_call.1} parent=31 // pred_region
          %s402 = ssub.s32 16, 16
          %403 = vsyncadd %s395, %s402
          %s404 = smul.addr %s25, 16
          %s405 = scalar_lea.hbm %s3, %s404
          %s407 = sshll.u32 %s397, 4
          %s408 = int_to_ptr.vmem [resolvable:$true] %s407
          %410 = dma.vmem_to_hbm [thread:$0]  %s408, 16, %s405, %s395
        $region48: #{tpu_custom_call.1} parent=31 // pred_fallthru
          _
      $region32: #{tpu_custom_call.1} parent=5 // pred_fallthru
        _
      %p411 = scmp.le.s32.totalorder 2, %s16
      // Predicated region
      $region49: #{tpu_custom_call.1} parent=5 // pred_check
        %p412 = pneg %p411
      $region50: #{tpu_custom_call.1} parent=5 // pred_check_branch
        %414 = sbr.rel (%p412) target = $region52
      $region51: #{tpu_custom_call.1} parent=5 // pred_region
        %s415 = ssub.s32 %s16, 2
        // Predicated region
        $region53: #{tpu_custom_call.1} parent=51 // pred_check
          %p416 = pneg %p127
        $region54: #{tpu_custom_call.1} parent=51 // pred_check_branch
          %418 = sbr.rel (%p416) target = $region56
        $region55: #{tpu_custom_call.1} parent=51 // pred_region
          %s419 = sand.u32 %s112, 1
          %s420 = scalar_lea.sflag [#allocation4], %s419
          %s421 = sand.u32 %s112, 1
          %s422 = scalar_lea.vmem [#allocation7], %s421
          %423 = dma.done %s420, 16
        $region56: #{tpu_custom_call.1} parent=51 // pred_fallthru
          _
      $region52: #{tpu_custom_call.1} parent=5 // pred_fallthru
        _
    $region6: #{tpu_custom_call.1} parent=1 // loop_footer
      %s20 = sadd.s32 1, %s16
    $region7: #{tpu_custom_call.1} parent=1 // loop_footer_branch
      %15 = sbr.rel target = $region3
    $region8: #{tpu_custom_call.1} parent=1 // loop_exit
      _
    %424 = vsyncpa [#allocation3], 1
    %s425 = scalar_lea.sflag [#allocation3], 1
    %426 = vsyncpa %s425, 1
    %427 = vsyncpa [#allocation6], 1
    %428 = vsyncpa [#allocation4], 1
    %s429 = scalar_lea.sflag [#allocation4], 1
    %430 = vsyncpa %s429, 1

</llo_original>
